<compile_context>
chip_gen: v5e
topology: v5e:2x2
jax: 0.10.0
libtpu: 0.0.40
codegen_flags: <defaults>
</compile_context>

<pallas_src>
import functools
import math

import jax
import jax.numpy as jnp
from jax.experimental import pallas as pl
from jax.experimental.pallas import tpu as pltpu


NEG_INF = -1e30  # large negative instead of -inf keeps exp/max NaN-free

# Generation-aware VMEM budget (~75% of physical: ~96 MiB v5e/v6e, ~48 MiB v7x).
try:
    _VMEM_LIMIT = int(pltpu.get_tpu_info().vmem_capacity_bytes) * 3 // 4
except Exception:  # pragma: no cover - fall back if the query is unavailable
    _VMEM_LIMIT = 48 * 1024 * 1024


def _round_up(x, m):
    return (x + m - 1) // m * m


def _row_tile(m, block_m):
    """Pick a row-tile size and padded extent for a (m, ...) matrix."""
    if m <= block_m:
        return m, m                      # full-dim block, no padding
    return block_m, _round_up(m, block_m)


# ---------------------------------------------------------------------------
# Kernel 1: fused Q/K/V projection
#   [q|k|v] = x @ [Wq|Wk|Wv] + [bq|bk|bv];  q *= 1/sqrt(d_head)
# ---------------------------------------------------------------------------
def _qkv_proj_kernel(x_ref, w_ref, b_ref, q_ref, k_ref, v_ref, *, d_model, q_scale):
    # One wide MXU matmul (bm, 3D) in bf16 with f32 accumulation.
    acc = jnp.dot(x_ref[...], w_ref[...], preferred_element_type=jnp.float32)
    acc = acc + b_ref[...]                                   # bias add in f32 (VPU)
    q_ref[...] = (acc[:, :d_model] * q_scale).astype(q_ref.dtype)
    k_ref[...] = acc[:, d_model:2 * d_model].astype(k_ref.dtype)
    v_ref[...] = acc[:, 2 * d_model:].astype(v_ref.dtype)


def _fused_qkv_projection(x2d, w_qkv, b_qkv, *, q_scale, block_m, out_dtype):
    """x2d: (M, D); w_qkv: (D, 3D); b_qkv: (1, 3D) f32.  Returns 3 x (M, D)."""
    M, d_in = x2d.shape
    d3 = w_qkv.shape[1]
    d_model = d3 // 3
    bm, Mp = _row_tile(M, block_m)
    xp = x2d if Mp == M else jnp.pad(x2d, ((0, Mp - M), (0, 0)))

    outs = pl.pallas_call(
        functools.partial(_qkv_proj_kernel, d_model=d_model, q_scale=q_scale),
        out_shape=tuple(jax.ShapeDtypeStruct((Mp, d_model), out_dtype)
                        for _ in range(3)),
        grid_spec=pltpu.PrefetchScalarGridSpec(
            num_scalar_prefetch=0,
            grid=(Mp // bm,),
            in_specs=[
                pl.BlockSpec((bm, d_in), lambda i: (i, 0)),          # x row tile
                # Weight is grid-invariant: single buffer halves its VMEM cost.
                pl.BlockSpec((d_in, d3), lambda i: (0, 0),
                             pipeline_mode=pl.Buffered(1)),
                pl.BlockSpec((1, d3), lambda i: (0, 0)),             # bias (tiny)
            ],
            out_specs=tuple(pl.BlockSpec((bm, d_model), lambda i: (i, 0))
                            for _ in range(3)),
        ),
        compiler_params=pltpu.CompilerParams(
            dimension_semantics=("parallel",),
            vmem_limit_bytes=_VMEM_LIMIT),
    )(xp, w_qkv, b_qkv)

    if Mp != M:
        outs = tuple(o[:M] for o in outs)
    return outs


# ---------------------------------------------------------------------------
# Kernel 1b: single linear projection (cross-attention fallback only)
# ---------------------------------------------------------------------------
def _linear_kernel(x_ref, w_ref, b_ref, o_ref, *, scale):
    acc = jnp.dot(x_ref[...], w_ref[...], preferred_element_type=jnp.float32)
    acc = acc + b_ref[...]
    if scale != 1.0:
        acc = acc * scale
    o_ref[...] = acc.astype(o_ref.dtype)


def _linear(x2d, w, b, *, scale, block_m, out_dtype):
    M, d_in = x2d.shape
    d_out = w.shape[1]
    bm, Mp = _row_tile(M, block_m)
    xp = x2d if Mp == M else jnp.pad(x2d, ((0, Mp - M), (0, 0)))

    out = pl.pallas_call(
        functools.partial(_linear_kernel, scale=scale),
        out_shape=jax.ShapeDtypeStruct((Mp, d_out), out_dtype),
        grid_spec=pltpu.PrefetchScalarGridSpec(
            num_scalar_prefetch=0,
            grid=(Mp // bm,),
            in_specs=[
                pl.BlockSpec((bm, d_in), lambda i: (i, 0)),
                pl.BlockSpec((d_in, d_out), lambda i: (0, 0),
                             pipeline_mode=pl.Buffered(1)),
                pl.BlockSpec((1, d_out), lambda i: (0, 0)),
            ],
            out_specs=pl.BlockSpec((bm, d_out), lambda i: (i, 0)),
        ),
        compiler_params=pltpu.CompilerParams(
            dimension_semantics=("parallel",),
            vmem_limit_bytes=_VMEM_LIMIT),
    )(xp, w, b)
    return out if Mp == M else out[:M]


# ---------------------------------------------------------------------------
# Kernel 2: causal flash attention on the packed-head (B, S, D) layout.
#   Triangular (q_block, kv_block) schedule via scalar prefetch; heads are
#   split in-kernel with static lane slices (no transpose / relayout).
# ---------------------------------------------------------------------------
def _mha_attn_kernel(qi_tab, ki_tab, q_ref, k_ref, v_ref, o_ref,
                     m_scr, l_scr, acc_scr, *, n_heads, d_head):
    t = pl.program_id(1)
    qi = qi_tab[t]
    ki = ki_tab[t]
    blk = q_ref.shape[1]

    @pl.when(ki == 0)                       # first kv block of each q row
    def _init():
        m_scr[...] = jnp.full(m_scr.shape, NEG_INF, dtype=jnp.float32)
        l_scr[...] = jnp.zeros(l_scr.shape, dtype=jnp.float32)
        acc_scr[...] = jnp.zeros(acc_scr.shape, dtype=jnp.float32)

    q = q_ref[0]                            # (blk, D) bf16; already * 1/sqrt(dh)
    k = k_ref[0]
    v = v_ref[0]

    def online_softmax_update(mask):
        # Static head loop: H back-to-back MXU dots on lane slices; per-head
        # running stats live in f32 VMEM scratch.
        for h in range(n_heads):
            sl = slice(h * d_head, (h + 1) * d_head)
            s = jax.lax.dot_general(q[:, sl], k[:, sl],
                                    (((1,), (1,)), ((), ())),
                                    preferred_element_type=jnp.float32)
            if mask is not None:
                s = jnp.where(mask, s, NEG_INF)
            m_prev = m_scr[h]
            m_new = jnp.maximum(m_prev, s.max(axis=-1, keepdims=True))
            alpha = jnp.exp(m_prev - m_new)
            p = jnp.exp(s - m_new)          # masked entries underflow to 0
            l_scr[h] = alpha * l_scr[h] + p.sum(axis=-1, keepdims=True)
            acc_scr[:, sl] = alpha * acc_scr[:, sl] + jnp.dot(
                p.astype(v.dtype), v[:, sl], preferred_element_type=jnp.float32)
            m_scr[h] = m_new

    @pl.when(ki < qi)                       # interior block: unmasked fast path
    def _interior():
        online_softmax_update(None)

    @pl.when(ki == qi)                      # diagonal: block-local lower-tri mask
    def _diagonal():
        row = jax.lax.broadcasted_iota(jnp.int32, (blk, blk), 0)
        col = jax.lax.broadcasted_iota(jnp.int32, (blk, blk), 1)
        online_softmax_update(col <= row)

    @pl.when(ki == qi)                      # diagonal is the last block per q row
    def _finalize():
        inv = pl.reciprocal(l_scr[...], approx=True)   # (H, blk, 1) on the EUP
        for h in range(n_heads):
            sl = slice(h * d_head, (h + 1) * d_head)
            acc_scr[:, sl] = acc_scr[:, sl] * inv[h]
        o_ref[0] = acc_scr[...].astype(o_ref.dtype)    # single lane-dense store


def _causal_attention(q, k, v, n_heads, *, block_seq, out_dtype):
    """q, k, v: (B, S, D) with heads packed along D.  Returns (B, S, D)."""
    assert q.shape == k.shape == v.shape
    B, S, D = q.shape
    d_head = D // n_heads

    blk = S if S <= block_seq else block_seq
    Sp = _round_up(S, blk)
    if Sp != S:
        pad = ((0, 0), (0, Sp - S), (0, 0))
        q, k, v = jnp.pad(q, pad), jnp.pad(k, pad), jnp.pad(v, pad)
    n_blk = Sp // blk

    # Flattened lower-triangular schedule: only blocks with ki <= qi are visited.
    qi_list, ki_list = [], []
    for qi in range(n_blk):
        for ki in range(qi + 1):
            qi_list.append(qi)
            ki_list.append(ki)
    qi_tab = jnp.asarray(qi_list, dtype=jnp.int32)
    ki_tab = jnp.asarray(ki_list, dtype=jnp.int32)
    n_steps = len(qi_list)

    out = pl.pallas_call(
        functools.partial(_mha_attn_kernel, n_heads=n_heads, d_head=d_head),
        out_shape=jax.ShapeDtypeStruct((B, Sp, D), out_dtype),
        grid_spec=pltpu.PrefetchScalarGridSpec(
            num_scalar_prefetch=2,
            grid=(B, n_steps),
            in_specs=[
                pl.BlockSpec((1, blk, D), lambda b, t, qt, kt: (b, qt[t], 0)),  # Q
                pl.BlockSpec((1, blk, D), lambda b, t, qt, kt: (b, kt[t], 0)),  # K
                pl.BlockSpec((1, blk, D), lambda b, t, qt, kt: (b, kt[t], 0)),  # V
            ],
            out_specs=pl.BlockSpec((1, blk, D), lambda b, t, qt, kt: (b, qt[t], 0)),
            scratch_shapes=[
                pltpu.VMEM((n_heads, blk, 1), jnp.float32),  # running max / head
                pltpu.VMEM((n_heads, blk, 1), jnp.float32),  # running denom / head
                pltpu.VMEM((blk, D), jnp.float32),           # f32 acc, all heads
            ],
        ),
        compiler_params=pltpu.CompilerParams(
            # batch axis shards across cores (megacore); triangular axis is a
            # sequential reduction.  NOTE: B == 1 leaves a v7x core idle.
            dimension_semantics=("parallel", "arbitrary"),
            vmem_limit_bytes=_VMEM_LIMIT),
    )(qi_tab, ki_tab, q, k, v)

    return out if Sp == S else out[:, :S, :]


# ---------------------------------------------------------------------------
# Full module forward
# ---------------------------------------------------------------------------
def multi_head_attention(query, key, value, wq, bq, wk, bk, wv, bv, n_heads,
                         *, compute_dtype=jnp.bfloat16,
                         block_m=256, block_seq=256):
    """query/key/value: (B, S, d_model). Weights (d_model, d_model) = W^T of
    nn.Linear; biases (d_model,).  Returns (B, S, d_model)."""
    B, S, D = query.shape
    assert key.shape == query.shape and value.shape == query.shape, \
        "matching (B, S, D) expected for q/k/v (causal attention)"
    assert D % n_heads == 0
    d_head = D // n_heads
    scale = 1.0 / math.sqrt(d_head)
    cd = compute_dtype

    if key is query and value is query:
        # Self-attention: fused QKV projection reads the activations once.
        w_qkv = jnp.concatenate([wq, wk, wv], axis=1).astype(cd)        # (D, 3D)
        b_qkv = jnp.concatenate([bq, bk, bv]).reshape(1, 3 * D).astype(jnp.float32)
        q2d, k2d, v2d = _fused_qkv_projection(
            query.reshape(B * S, D).astype(cd), w_qkv, b_qkv,
            q_scale=scale, block_m=block_m, out_dtype=cd)
    else:
        # Cross-attention fallback: three separate (un-fused) projections.
        q2d = _linear(query.reshape(B * S, D).astype(cd), wq.astype(cd),
                      bq.reshape(1, D).astype(jnp.float32),
                      scale=scale, block_m=block_m, out_dtype=cd)
        k2d = _linear(key.reshape(B * S, D).astype(cd), wk.astype(cd),
                      bk.reshape(1, D).astype(jnp.float32),
                      scale=1.0, block_m=block_m, out_dtype=cd)
        v2d = _linear(value.reshape(B * S, D).astype(cd), wv.astype(cd),
                      bv.reshape(1, D).astype(jnp.float32),
                      scale=1.0, block_m=block_m, out_dtype=cd)

    # (B*S, D) -> (B, S, D) is a pure metadata reshape; heads remain packed
    # along the lane dim (head h = columns [h*d_head, (h+1)*d_head)), so no
    # transpose/HBM round-trips are needed before or after attention, and the
    # attention output is already the merged-heads (B, S, d_model) layout.
    z = _causal_attention(q2d.reshape(B, S, D),
                          k2d.reshape(B, S, D),
                          v2d.reshape(B, S, D),
                          n_heads, block_seq=block_seq, out_dtype=query.dtype)
    # dropout: identity (eval mode)
    return z


# ---------------------------------------------------------------------------
# Reference + smoke test
# ---------------------------------------------------------------------------
def _reference_mha(query, key, value, wq, bq, wk, bk, wv, bv, n_heads):
    B, S, D = query.shape
    dh = D // n_heads

    def proj(x, w, b):
        return (x @ w + b).reshape(B, S, n_heads, dh).transpose(0, 2, 1, 3)

    q = proj(query, wq, bq)
    k = proj(key, wk, bk)
    v = proj(value, wv, bv)
    attn = jnp.einsum("bhqd,bhkd->bhqk", q, k) / math.sqrt(dh)
    causal = jnp.triu(jnp.ones((S, S), dtype=bool), k=1)
    attn = jnp.where(causal[None, None], -jnp.inf, attn)
    attn = jax.nn.softmax(attn, axis=-1)
    z = jnp.einsum("bhqk,bhkd->bhqd", attn, v)
    return z.transpose(0, 2, 1, 3).reshape(B, S, D)


if __name__ == "__main__":
    batch, seq, d_model, n_heads = 2, 8, 32, 4

    root = jax.random.PRNGKey(0)
    kx, kwq, kbq, kwk, kbk, kwv, kbv = jax.random.split(root, 7)

    bound = 1.0 / math.sqrt(d_model)
    wq = jax.random.uniform(kwq, (d_model, d_model), jnp.float32, -bound, bound)
    bq = jax.random.uniform(kbq, (d_model,), jnp.float32, -bound, bound)
    wk = jax.random.uniform(kwk, (d_model, d_model), jnp.float32, -bound, bound)
    bk = jax.random.uniform(kbk, (d_model,), jnp.float32, -bound, bound)
    wv = jax.random.uniform(kwv, (d_model, d_model), jnp.float32, -bound, bound)
    bv = jax.random.uniform(kbv, (d_model,), jnp.float32, -bound, bound)

    x = jax.random.normal(kx, (batch, seq, d_model), jnp.float32)

    out = multi_head_attention(x, x, x, wq, bq, wk, bk, wv, bv, n_heads)
    out = jax.block_until_ready(out)

    ref = _reference_mha(x, x, x, wq, bq, wk, bk, wv, bv, n_heads)

    assert out.shape == (batch, seq, d_model)
    err = float(jnp.max(jnp.abs(out - ref)))
    # bf16 MXU path + approx reciprocal vs f32 reference -> loose tolerance
    assert jnp.allclose(out, ref, atol=3e-2, rtol=3e-2), f"max abs err = {err}"

    print("KERNEL_OK")
</pallas_src>

<mosaic_0001>
module attributes {stable_mosaic.version = 11 : i64} {
  func.func @_qkv_proj_kernel(%arg0: i32, %arg1: memref<16x32xbf16, #tpu.memory_space<vmem>>, %arg2: memref<32x96xbf16, #tpu.memory_space<vmem>>, %arg3: memref<1x96xf32, #tpu.memory_space<vmem>>, %arg4: memref<16x32xbf16, #tpu.memory_space<vmem>>, %arg5: memref<16x32xbf16, #tpu.memory_space<vmem>>, %arg6: memref<16x32xbf16, #tpu.memory_space<vmem>>) attributes {dimension_semantics = [#tpu.dimension_semantics<parallel>], iteration_bounds = array<i64: 1>, scalar_prefetch = 0 : i64, scratch_operands = 0 : i64, tpu.core_type = #tpu.core_type<tc>, window_params = [{transform_indices = @transform_0, window_bounds = array<i64: 16, 32>}, {pipeline_mode = #tpu.pipeline_mode<synchronous>, transform_indices = @transform_1, window_bounds = array<i64: 32, 96>}, {pipeline_mode = #tpu.pipeline_mode<synchronous>, transform_indices = @transform_2, window_bounds = array<i64: 1, 96>}, {transform_indices = @transform_3, window_bounds = array<i64: 16, 32>}, {transform_indices = @transform_4, window_bounds = array<i64: 16, 32>}, {transform_indices = @transform_5, window_bounds = array<i64: 16, 32>}]} {
    %c0 = arith.constant 0 : index
    %c0_0 = arith.constant 0 : index
    %0 = vector.load %arg1[%c0, %c0_0] : memref<16x32xbf16, #tpu.memory_space<vmem>>, vector<16x32xbf16>
    %c0_1 = arith.constant 0 : index
    %c0_2 = arith.constant 0 : index
    %1 = vector.load %arg2[%c0_1, %c0_2] : memref<32x96xbf16, #tpu.memory_space<vmem>>, vector<32x96xbf16>
    %cst = arith.constant dense<0.000000e+00> : vector<16x96xf32>
    %2 = tpu.matmul %0, %1, %cst {dimension_numbers = #tpu.dot_dimension_numbers<[1], [0], [0], [1], [0, 0, 1, 1], [], []>} : vector<16x32xbf16>, vector<32x96xbf16>, vector<16x96xf32> -> vector<16x96xf32>
    %c0_3 = arith.constant 0 : index
    %c0_4 = arith.constant 0 : index
    %3 = vector.load %arg3[%c0_3, %c0_4] : memref<1x96xf32, #tpu.memory_space<vmem>>, vector<1x96xf32>
    %4 = vector.broadcast %3 : vector<1x96xf32> to vector<16x96xf32>
    %5 = arith.addf %2, %4 : vector<16x96xf32>
    %6 = vector.extract_strided_slice %5 {offsets = [0, 0], sizes = [16, 32], strides = [1, 1]} : vector<16x96xf32> to vector<16x32xf32>
    %cst_5 = arith.constant 0.353553385 : f32
    %7 = vector.broadcast %cst_5 : f32 to vector<16x32xf32>
    %8 = arith.mulf %6, %7 : vector<16x32xf32>
    %9 = arith.truncf %8 : vector<16x32xf32> to vector<16x32xbf16>
    %c0_6 = arith.constant 0 : index
    %c0_7 = arith.constant 0 : index
    %10 = vector.load %arg4[%c0_6, %c0_7] : memref<16x32xbf16, #tpu.memory_space<vmem>>, vector<16x32xbf16>
    tpu.vector_store %arg4[%c0_6, %c0_7], %9 {strides = array<i32>} : memref<16x32xbf16, #tpu.memory_space<vmem>>, vector<16x32xbf16>,
    %11 = vector.extract_strided_slice %5 {offsets = [0, 32], sizes = [16, 32], strides = [1, 1]} : vector<16x96xf32> to vector<16x32xf32>
    %12 = arith.truncf %11 : vector<16x32xf32> to vector<16x32xbf16>
    %c0_8 = arith.constant 0 : index
    %c0_9 = arith.constant 0 : index
    %13 = vector.load %arg5[%c0_8, %c0_9] : memref<16x32xbf16, #tpu.memory_space<vmem>>, vector<16x32xbf16>
    tpu.vector_store %arg5[%c0_8, %c0_9], %12 {strides = array<i32>} : memref<16x32xbf16, #tpu.memory_space<vmem>>, vector<16x32xbf16>,
    %14 = vector.extract_strided_slice %5 {offsets = [0, 64], sizes = [16, 32], strides = [1, 1]} : vector<16x96xf32> to vector<16x32xf32>
    %15 = arith.truncf %14 : vector<16x32xf32> to vector<16x32xbf16>
    %c0_10 = arith.constant 0 : index
    %c0_11 = arith.constant 0 : index
    %16 = vector.load %arg6[%c0_10, %c0_11] : memref<16x32xbf16, #tpu.memory_space<vmem>>, vector<16x32xbf16>
    tpu.vector_store %arg6[%c0_10, %c0_11], %15 {strides = array<i32>} : memref<16x32xbf16, #tpu.memory_space<vmem>>, vector<16x32xbf16>,
    return
  }
  func.func @transform_0(%arg0: i32) -> (i32, i32) {
    %c0_i32 = arith.constant 0 : i32
    %c0_i32_0 = arith.constant 0 : i32
    return %arg0, %c0_i32 : i32, i32
  }
  func.func @transform_1(%arg0: i32) -> (i32, i32) {
    %c0_i32 = arith.constant 0 : i32
    %c0_i32_0 = arith.constant 0 : i32
    %c0_i32_1 = arith.constant 0 : i32
    return %c0_i32, %c0_i32_0 : i32, i32
  }
  func.func @transform_2(%arg0: i32) -> (i32, i32) {
    %c0_i32 = arith.constant 0 : i32
    %c0_i32_0 = arith.constant 0 : i32
    %c0_i32_1 = arith.constant 0 : i32
    return %c0_i32, %c0_i32_0 : i32, i32
  }
  func.func @transform_3(%arg0: i32) -> (i32, i32) {
    %c0_i32 = arith.constant 0 : i32
    %c0_i32_0 = arith.constant 0 : i32
    return %arg0, %c0_i32 : i32, i32
  }
  func.func @transform_4(%arg0: i32) -> (i32, i32) {
    %c0_i32 = arith.constant 0 : i32
    %c0_i32_0 = arith.constant 0 : i32
    return %arg0, %c0_i32 : i32, i32
  }
  func.func @transform_5(%arg0: i32) -> (i32, i32) {
    %c0_i32 = arith.constant 0 : i32
    %c0_i32_0 = arith.constant 0 : i32
    return %arg0, %c0_i32 : i32, i32
  }
}

</mosaic_0001>

<llo_original>
// kernel: tpu_custom_call.1
$region0: #{tpu_custom_call.1}
  #allocation0 [shape = 'u32[]', space=smem, size = 0x4, offset = 0x4, fixed_abs, tag = 'smem constant byte address 0x4 - core index']
  #allocation1 [shape = 'u32[72,128]{1,0:T(1,128)}', space=vmem, size = 0x9000, scoped, tag = 'internal scratch']
  %s0 = inlined_call_operand.hbm [shape: bf16[16,32], index: 0, kind: input, shape index: {}]
  %s1 = inlined_call_operand.hbm [shape: bf16[32,96], index: 1, kind: input, shape index: {}]
  %s2 = inlined_call_operand.vmem [shape: f32[1,96], index: 2, kind: input, shape index: {}]
  %s3 = inlined_call_operand.hbm [shape: bf16[16,32], index: 3, kind: output, shape index: {0}]
  %s4 = inlined_call_operand.hbm [shape: bf16[16,32], index: 4, kind: output, shape index: {1}]
  %s5 = inlined_call_operand.hbm [shape: bf16[16,32], index: 5, kind: output, shape index: {2}]
  %6 = xla_tuple %s3, %s4, %s5
  %s7 = sld [smem:[#allocation0]]
  $region46: #{tpu_custom_call.1} parent=0
    _
  %s9 = ssub.s32 1, %s7
  %s10 = scalar_select 0, %s9, %s7
  $region1: #{tpu_custom_call.1} parent=0
    #allocation2 [shape = 'u8[4096]{0}', space=vmem, size = 0x1000, scoped, tag = 'input window, operand 0, single buffered']
    #allocation3 [shape = 's32[1]{0}', space=sflag, size = 0x4, scoped, tag = 'scoped memory for tpu_custom_call.1']
    #allocation4 [shape = 's32[1]{0}', space=sflag, size = 0x4, scoped, tag = 'scoped memory for tpu_custom_call.1']
    #allocation5 [shape = 'u8[8192]{0}', space=vmem, size = 0x2000, scoped, tag = 'input window, operand 1, single buffered']
    #allocation6 [shape = 's32[1]{0}', space=sflag, size = 0x4, scoped, tag = 'scoped memory for tpu_custom_call.1']
    #allocation7 [shape = 'u8[4096]{0}', space=vmem, size = 0x1000, scoped, tag = 'output window, operand 0, single buffered']
    #allocation8 [shape = 'u8[4096]{0}', space=vmem, size = 0x1000, scoped, tag = 'output window, operand 1, single buffered']
    #allocation9 [shape = 's32[1]{0}', space=sflag, size = 0x4, scoped, tag = 'scoped memory for tpu_custom_call.1']
    #allocation10 [shape = 'u8[4096]{0}', space=vmem, size = 0x1000, scoped, tag = 'output window, operand 2, single buffered']
    %11 = vsyncpa [#allocation3], 0
    %12 = vsyncpa [#allocation6], 0
    %13 = vsyncpa [#allocation4], 0
    %14 = vsyncpa [#allocation9], 0
    // Predicated region
    $region2: #{tpu_custom_call.1} parent=1 // pred_check
      _
    $region3: #{tpu_custom_call.1} parent=1 // pred_check_branch
      %16 = sbr.rel (0) target = $region5
    $region4: #{tpu_custom_call.1} parent=1 // pred_region
      %18 = vsyncadd [#allocation3], 0
      %s19 = sshll.u32 %s0, 4
      %s20 = int_to_ptr.hbm [resolvable:$true] %s19
      %s21 = sshll.u32 [#allocation2], 4
      %s22 = int_to_ptr.vmem [resolvable:$true] %s21
      %27 = dma.hbm_to_vmem [thread:$0]  %s20, 128, %s22, [#allocation3], 64, 64, 4
    $region5: #{tpu_custom_call.1} parent=1 // pred_fallthru
      _
    // Predicated region
    $region6: #{tpu_custom_call.1} parent=1 // pred_check
      _
    $region7: #{tpu_custom_call.1} parent=1 // pred_check_branch
      %29 = sbr.rel (0) target = $region9
    $region8: #{tpu_custom_call.1} parent=1 // pred_region
      %31 = vsyncadd [#allocation6], 0
      %s32 = sshll.u32 %s1, 4
      %s33 = int_to_ptr.hbm [resolvable:$true] %s32
      %s34 = sshll.u32 [#allocation5], 4
      %s35 = int_to_ptr.vmem [resolvable:$true] %s34
      %40 = dma.hbm_to_vmem [thread:$0]  %s33, 256, %s35, [#allocation6], 64, 64, 4
    $region9: #{tpu_custom_call.1} parent=1 // pred_fallthru
      _
    // Predicated region
    $region10: #{tpu_custom_call.1} parent=1 // pred_check
      _
    $region11: #{tpu_custom_call.1} parent=1 // pred_check_branch
      %42 = sbr.rel (0) target = $region13
    $region12: #{tpu_custom_call.1} parent=1 // pred_region
      _
    $region13: #{tpu_custom_call.1} parent=1 // pred_fallthru
      _
    // Predicated region
    $region14: #{tpu_custom_call.1} parent=1 // pred_check
      _
    $region15: #{tpu_custom_call.1} parent=1 // pred_check_branch
      %44 = sbr.rel (0) target = $region17
    $region16: #{tpu_custom_call.1} parent=1 // pred_region
      %46 = dma.done [#allocation3], 128
    $region17: #{tpu_custom_call.1} parent=1 // pred_fallthru
      _
    // Predicated region
    $region18: #{tpu_custom_call.1} parent=1 // pred_check
      _
    $region19: #{tpu_custom_call.1} parent=1 // pred_check_branch
      %48 = sbr.rel (0) target = $region21
    $region20: #{tpu_custom_call.1} parent=1 // pred_region
      %50 = dma.done [#allocation6], 256
    $region21: #{tpu_custom_call.1} parent=1 // pred_fallthru
      _
    %v52 = vld [vmem:[#allocation2] sm:$0xf]
    %v53 = vld [vmem:[#allocation2 + $0x4] sm:$0xf]
    %v54 = vld [vmem:[#allocation5] sm:$0xf]
    %v55 = vld [vmem:[#allocation5 + $0x4] sm:$0xf]
    %v56 = vld [vmem:[#allocation5 + $0x8] sm:$0xf]
    %v57 = vld [vmem:[#allocation5 + $0xc] sm:$0xf]
    %v58 = vld [vmem:[%s2] sm:$0x1]
    %v60 = vperm.slane %v58, 0
    %v64 = vunpack.c.l.b16 %v52
    %v65 = vunpack.c.l.b16 %v53
    %v66 = vpack.c.b16 %v65, %v64
    %v71 = vunpack.c.l.b16 %v54
    %v72 = vunpack.c.l.b16 %v55
    %v73 = vunpack.c.l.b16 %v56
    %v74 = vunpack.c.l.b16 %v57
    %v75 = vpack.c.b16 %v72, %v71
    %v76 = vpack.c.b16 %v74, %v73
    %vm79 = vcmask 261120
    %v81 = vsel %vm79, %v66, 0
    %83 = vmatpush.bf16.msra.mxu0 0
    %84 = vmatpush.bf16.msra.mxu0 0
    %85 = vmatpush.bf16.msra.mxu0 0
    %86 = vmatpush.bf16.msra.mxu0 0
    %87 = vmatpush.bf16.msra.mxu0 0
    %88 = vmatpush.bf16.msra.mxu0 0
    %89 = vmatpush.bf16.msra.mxu0 %v76
    %90 = vmatpush.bf16.msra.mxu0 %v75
    %91 = vmatmul.bf16.gmra.mxu0 %v81
    %v92 = vpop.f32.mrf.mxu0
    %v93 = vadd.f32 %v60, %v92
    %v94 = vpop.f32.mrf.mxu0
    %v95 = vadd.f32 %v60, %v94
    %96 = vdwg.mxu0
    %v97 = vmul.f32 %v93, 0.35355338
    %v98 = vmul.f32 %v95, 0.35355338
    %v99 = vpack.c.bf16 %v97, %v97
    %v100 = vpack.c.bf16 %v98, %v98
    %vm101 = vcmask 257024
    %102 = vst.msk [vmem:[#allocation7] sm:$0xf] %vm101, %v99
    %103 = vst.msk [vmem:[#allocation7 + $0x4] sm:$0xf] %vm101, %v100
    %v104 = vpack.c.bf16 %v93, %v93
    %v105 = vpack.c.bf16 %v95, %v95
    %108 = vrot.lane.b32.xlu0 %v104, 96
    %v109 = vpop.permute.xlu0 %108
    %110 = vrot.lane.b32.xlu0 %v105, 96
    %v111 = vpop.permute.xlu0 %110
    %114 = vst.msk [vmem:[#allocation8] sm:$0xf] %vm101, %v109
    %115 = vst.msk [vmem:[#allocation8 + $0x4] sm:$0xf] %vm101, %v111
    %116 = vrot.lane.b32.xlu0 %v104, 64
    %v117 = vpop.permute.xlu0 %116
    %118 = vrot.lane.b32.xlu0 %v105, 64
    %v119 = vpop.permute.xlu0 %118
    %122 = vst.msk [vmem:[#allocation10] sm:$0xf] %vm101, %v117
    %123 = vst.msk [vmem:[#allocation10 + $0x4] sm:$0xf] %vm101, %v119
    // Predicated region
    $region22: #{tpu_custom_call.1} parent=1 // pred_check
      _
    $region23: #{tpu_custom_call.1} parent=1 // pred_check_branch
      %125 = sbr.rel (0) target = $region25
    $region24: #{tpu_custom_call.1} parent=1 // pred_region
      %127 = vsyncadd [#allocation4], 0
      %s128 = sshll.u32 [#allocation7], 4
      %s129 = int_to_ptr.vmem [resolvable:$true] %s128
      %s130 = sshll.u32 %s3, 4
      %s131 = int_to_ptr.hbm [resolvable:$true] %s130
      %136 = dma.vmem_to_hbm [thread:$0]  %s129, 128, %s131, [#allocation4], 64, 64, 4
    $region25: #{tpu_custom_call.1} parent=1 // pred_fallthru
      _
    // Predicated region
    $region26: #{tpu_custom_call.1} parent=1 // pred_check
      _
    $region27: #{tpu_custom_call.1} parent=1 // pred_check_branch
      %138 = sbr.rel (0) target = $region29
    $region28: #{tpu_custom_call.1} parent=1 // pred_region
      %140 = vsyncadd [#allocation9], 0
      %s141 = sshll.u32 [#allocation8], 4
      %s142 = int_to_ptr.vmem [resolvable:$true] %s141
      %s143 = sshll.u32 %s4, 4
      %s144 = int_to_ptr.hbm [resolvable:$true] %s143
      %149 = dma.vmem_to_hbm [thread:$0]  %s142, 128, %s144, [#allocation9], 64, 64, 4
    $region29: #{tpu_custom_call.1} parent=1 // pred_fallthru
      _
    // Predicated region
    $region30: #{tpu_custom_call.1} parent=1 // pred_check
      _
    $region31: #{tpu_custom_call.1} parent=1 // pred_check_branch
      %151 = sbr.rel (0) target = $region33
    $region32: #{tpu_custom_call.1} parent=1 // pred_region
      %153 = vsyncadd [#allocation9], 0
      %s154 = sshll.u32 [#allocation10], 4
      %s155 = int_to_ptr.vmem [resolvable:$true] %s154
      %s156 = sshll.u32 %s5, 4
      %s157 = int_to_ptr.hbm [resolvable:$true] %s156
      %162 = dma.vmem_to_hbm [thread:$0]  %s155, 128, %s157, [#allocation9], 64, 64, 4
    $region33: #{tpu_custom_call.1} parent=1 // pred_fallthru
      _
    // Predicated region
    $region34: #{tpu_custom_call.1} parent=1 // pred_check
      _
    $region35: #{tpu_custom_call.1} parent=1 // pred_check_branch
      %164 = sbr.rel (0) target = $region37
    $region36: #{tpu_custom_call.1} parent=1 // pred_region
      %166 = dma.done [#allocation4], 128
    $region37: #{tpu_custom_call.1} parent=1 // pred_fallthru
      _
    // Predicated region
    $region38: #{tpu_custom_call.1} parent=1 // pred_check
      _
    $region39: #{tpu_custom_call.1} parent=1 // pred_check_branch
      %168 = sbr.rel (0) target = $region41
    $region40: #{tpu_custom_call.1} parent=1 // pred_region
      %170 = dma.done [#allocation9], 128
    $region41: #{tpu_custom_call.1} parent=1 // pred_fallthru
      _
    // Predicated region
    $region42: #{tpu_custom_call.1} parent=1 // pred_check
      _
    $region43: #{tpu_custom_call.1} parent=1 // pred_check_branch
      %172 = sbr.rel (0) target = $region45
    $region44: #{tpu_custom_call.1} parent=1 // pred_region
      %174 = dma.done [#allocation9], 128
    $region45: #{tpu_custom_call.1} parent=1 // pred_fallthru
      _
    %175 = vsyncpa [#allocation3], 1
    %176 = vsyncpa [#allocation6], 1
    %177 = vsyncpa [#allocation4], 1
    %178 = vsyncpa [#allocation9], 1

</llo_original>
